<compile_context>
chip_gen: v7x
topology: tpu7x:2x2x1
jax: 0.10.0
libtpu: 0.0.40
codegen_flags: <defaults>
</compile_context>

<pallas_src>
import functools

import jax
import jax.numpy as jnp
from jax import lax
from jax.experimental import pallas as pl
from jax.experimental.pallas import tpu as pltpu


_MXU_DTYPE = jnp.bfloat16          # MXU operand dtype; accumulation stays f32.
_VMEM_LIMIT = 48 * 1024 * 1024     # safe on v5e/v6e (128 MiB) and v7x (64 MiB).


def _largest_divisor_leq(n, cap):
    d = max(1, min(n, cap))
    while n % d:
        d -= 1
    return d


def _batch_tile(batch, seq_len, budget_bytes=16 << 20):
    """Batch rows per explore-kernel step; keeps (bb, S, S) f32 under budget."""
    cap = max(1, budget_bytes // max(seq_len * seq_len * 4, 1))
    return _largest_divisor_leq(batch, min(8, cap))


def _doc_tile(n_docs, dim, target_bytes=4 << 20):
    """KB row-tile: multiple of 128 rows, ~target_bytes per tile, or full N."""
    if n_docs <= 128:
        return n_docs
    t = max(128, (target_bytes // max(dim * 4, 1)) // 128 * 128)
    if t >= n_docs:
        return n_docs
    return t


# ----------------------------------------------------------------------------
# Kernel 1: fused exploration (pairwise dist + top_n) + RAG score + mean-pool
# ----------------------------------------------------------------------------
def _explore_score_kernel(emb_ref, w_ref, b_ref,
                          score_ref, qmean_ref, nd_ref, ni_ref, *, top_n):
    e = emb_ref[...].astype(jnp.float32)                        # (bb, S, D)
    _, S, D = e.shape

    # Pairwise squared Euclidean distances: ||a||^2 + ||b||^2 - 2 a.b
    # Batched MXU dot contracting D on both operands (no explicit .T),
    # bf16 operands with f32 accumulation, clamped at 0.
    e_mx = e.astype(_MXU_DTYPE)
    dots = jnp.einsum("bsd,btd->bst", e_mx, e_mx,
                      preferred_element_type=jnp.float32)       # (bb, S, S)
    sq = jnp.sum(e * e, axis=-1)                                # (bb, S) f32
    dist = jnp.maximum(sq[:, :, None] + sq[:, None, :] - 2.0 * dots, 0.0)

    # RAG score on the VPU: lane-aligned (1, D) weight row, reduce over lanes.
    lin = jnp.sum(e * w_ref[...], axis=-1) + b_ref[0, 0]        # (bb, S)
    mean_dist = jnp.mean(dist, axis=-1)                         # (bb, S)
    score_ref[...] = jax.nn.sigmoid(lin - mean_dist / float(D))

    # Mean pool over S for the retriever (embeddings already resident in VMEM).
    qmean_ref[...] = jnp.mean(e, axis=1)                        # (bb, D)

    # Fused top_n smallest distances + indices: iterative min extraction
    # (top_n is small and static -> unrolled; VPU/XLU only, no HBM (S,S) dump).
    iota = lax.broadcasted_iota(jnp.int32, dist.shape, 2)       # (bb, S, S)
    work = dist
    for t in range(top_n):
        minval = jnp.min(work, axis=-1, keepdims=True)          # (bb, S, 1)
        minidx = jnp.min(jnp.where(work <= minval, iota, S),
                         axis=-1, keepdims=True)                # (bb, S, 1)
        nd_ref[:, :, pl.ds(t, 1)] = minval
        ni_ref[:, :, pl.ds(t, 1)] = minidx
        work = jnp.where(iota == minidx, jnp.inf, work)


def explore_and_score(query_embeddings, w_score, b_score, *, top_n):
    """(B,S,D) f32 -> scores (B,S), mean query (B,D), top_n dists/idx (B,S,n)."""
    B, S, D = query_embeddings.shape
    assert top_n <= S, "top_n must not exceed the sequence length"
    bb = _batch_tile(B, S)
    kernel = functools.partial(_explore_score_kernel, top_n=top_n)
    score, qmean, nd, ni = pl.pallas_call(
        kernel,
        out_shape=(
            jax.ShapeDtypeStruct((B, S), jnp.float32),
            jax.ShapeDtypeStruct((B, D), jnp.float32),
            jax.ShapeDtypeStruct((B, S, top_n), jnp.float32),
            jax.ShapeDtypeStruct((B, S, top_n), jnp.int32),
        ),
        grid_spec=pltpu.PrefetchScalarGridSpec(
            num_scalar_prefetch=0,
            grid=(B // bb,),
            in_specs=[
                pl.BlockSpec((bb, S, D), lambda b: (b, 0, 0)),
                pl.BlockSpec((1, D), lambda b: (0, 0)),
                pl.BlockSpec(memory_space=pltpu.MemorySpace.SMEM),
            ],
            out_specs=[
                pl.BlockSpec((bb, S), lambda b: (b, 0)),
                pl.BlockSpec((bb, D), lambda b: (b, 0)),
                pl.BlockSpec((bb, S, top_n), lambda b: (b, 0, 0)),
                pl.BlockSpec((bb, S, top_n), lambda b: (b, 0, 0)),
            ],
        ),
        compiler_params=pltpu.CompilerParams(
            dimension_semantics=("parallel",),
            vmem_limit_bytes=_VMEM_LIMIT),
    )(query_embeddings, w_score, b_score)
    return score, qmean, nd, ni


# ----------------------------------------------------------------------------
# Kernel 2: retrieval similarities (mean-pooled query vs streamed KB tiles)
# ----------------------------------------------------------------------------
def _retrieve_kernel(qmean_ref, kb_ref, sims_ref):
    q = qmean_ref[...].astype(_MXU_DTYPE)                       # (B, D)
    kb = kb_ref[...].astype(_MXU_DTYPE)                         # (tn, D)
    sims_ref[...] = lax.dot_general(                            # (B, tn)
        q, kb, dimension_numbers=(((1,), (1,)), ((), ())),
        preferred_element_type=jnp.float32)


def retrieval_similarities(query_mean, kb_embeddings):
    """query_mean (B, D), kb (N, D) -> sims (B, N); KB streamed in N-tiles."""
    B, D = query_mean.shape
    N, _ = kb_embeddings.shape
    tn = _doc_tile(N, D)
    return pl.pallas_call(
        _retrieve_kernel,
        out_shape=jax.ShapeDtypeStruct((B, N), jnp.float32),
        grid_spec=pltpu.PrefetchScalarGridSpec(
            num_scalar_prefetch=0,
            grid=(pl.cdiv(N, tn),),
            in_specs=[
                pl.BlockSpec((B, D), lambda n: (0, 0)),
                pl.BlockSpec((tn, D), lambda n: (n, 0)),
            ],
            out_specs=pl.BlockSpec((B, tn), lambda n: (0, n)),
        ),
        compiler_params=pltpu.CompilerParams(
            dimension_semantics=("parallel",),
            vmem_limit_bytes=_VMEM_LIMIT),
    )(query_mean, kb_embeddings)


# ----------------------------------------------------------------------------
# Full forward pass (glue + kernels)
# ----------------------------------------------------------------------------
@functools.partial(jax.jit, static_argnames=("top_n", "top_k"))
def rag_query_optimizer_forward(query_tokens, embedding_table, w_score,
                                b_score, kb_embeddings, *, top_n, top_k):
    # TokenEmbedder: embedding lookup (gather) — glue.
    query_embeddings = jnp.take(embedding_table, query_tokens, axis=0)  # (B,S,D)
    query_embeddings = query_embeddings.astype(jnp.float32)

    # ExploratoryMechanism (+ top_n) + RAGScorer + mean-pool (fused kernel).
    rag_scores, query_mean, exp_distances, exp_indices = explore_and_score(
        query_embeddings, w_score, b_score, top_n=top_n)

    # QueryReconstructor: reorder tokens by descending rag score — glue.
    order = jnp.argsort(-rag_scores, axis=-1)
    reconstructed_query = jnp.take_along_axis(query_tokens, order, axis=-1)

    # Retriever: mean-pooled query vs knowledge base (Pallas kernel) + top_k.
    sims = retrieval_similarities(query_mean, kb_embeddings)
    _, retrieved_indices = lax.top_k(sims, top_k)

    return (reconstructed_query, rag_scores, retrieved_indices,
            exp_distances, exp_indices)


if __name__ == "__main__":
    # Small, deterministic synthetic setup.
    B, S, D = 2, 8, 32            # batch, seq_len, embedding_dim
    VOCAB = 100
    N_DOCS = 64
    TOP_N, TOP_K = 3, 4

    key = jax.random.PRNGKey(0)
    k_tok, k_emb, k_w, k_kb = jax.random.split(key, 4)

    query_tokens = jax.random.randint(k_tok, (B, S), 0, VOCAB, dtype=jnp.int32)
    embedding_table = jax.random.normal(k_emb, (VOCAB, D), dtype=jnp.float32) * 0.1
    w_score = jax.random.normal(k_w, (1, D), dtype=jnp.float32) * 0.1   # lane-aligned row
    b_score = jnp.zeros((1, 1), dtype=jnp.float32)
    kb_embeddings = jax.random.normal(k_kb, (N_DOCS, D), dtype=jnp.float32) * 0.1

    outs = rag_query_optimizer_forward(
        query_tokens, embedding_table, w_score, b_score, kb_embeddings,
        top_n=TOP_N, top_k=TOP_K)
    outs = jax.block_until_ready(outs)

    reconstructed_query, rag_scores, retrieved_indices, exp_dist, exp_idx = outs
    assert reconstructed_query.shape == (B, S)
    assert rag_scores.shape == (B, S)
    assert retrieved_indices.shape == (B, TOP_K)
    assert exp_dist.shape == (B, S, TOP_N)
    assert exp_idx.shape == (B, S, TOP_N)
    assert bool(jnp.all(jnp.isfinite(rag_scores)))
    assert bool(jnp.all(exp_dist >= 0.0))
    # top_n distances are emitted in ascending order by construction.
    assert bool(jnp.all(exp_dist[..., :-1] <= exp_dist[..., 1:] + 1e-5))

    # Pure-JAX reference check (bf16 MXU tolerance).
    ref_emb = jnp.take(embedding_table, query_tokens, axis=0)
    diff = ref_emb[:, :, None, :] - ref_emb[:, None, :, :]
    ref_dist = jnp.sum(diff * diff, axis=-1)
    ref_score = jax.nn.sigmoid(
        jnp.einsum("bsd,d->bs", ref_emb, w_score[0]) + b_score[0, 0]
        - jnp.mean(ref_dist, axis=-1) / D)
    assert bool(jnp.allclose(rag_scores, ref_score, atol=5e-2, rtol=5e-2))
    ref_topn = -lax.top_k(-ref_dist, TOP_N)[0]
    assert bool(jnp.allclose(exp_dist, ref_topn, atol=5e-2, rtol=5e-2))
    ref_sims = jnp.mean(ref_emb, axis=1) @ kb_embeddings.T
    kernel_sims = retrieval_similarities(jnp.mean(ref_emb, axis=1), kb_embeddings)
    assert bool(jnp.allclose(kernel_sims, ref_sims, atol=5e-2, rtol=5e-2))

    print("KERNEL_OK")
</pallas_src>

<mosaic_0001>
module attributes {stable_mosaic.version = 11 : i64} {
  func.func @_explore_score_kernel(%arg0: i32, %arg1: memref<2x8x32xf32, #tpu.memory_space<vmem>>, %arg2: memref<1x32xf32, #tpu.memory_space<vmem>>, %arg3: memref<1x1xf32, #tpu.memory_space<smem>>, %arg4: memref<2x8xf32, #tpu.memory_space<vmem>>, %arg5: memref<2x32xf32, #tpu.memory_space<vmem>>, %arg6: memref<2x8x3xf32, #tpu.memory_space<vmem>>, %arg7: memref<2x8x3xi32, #tpu.memory_space<vmem>>) attributes {dimension_semantics = [#tpu.dimension_semantics<parallel>], iteration_bounds = array<i64: 1>, scalar_prefetch = 0 : i64, scratch_operands = 0 : i64, tpu.core_type = #tpu.core_type<tc>, window_params = [{transform_indices = @transform_0, window_bounds = array<i64: 2, 8, 32>}, {pipeline_mode = #tpu.pipeline_mode<synchronous>, transform_indices = @transform_1, window_bounds = array<i64: 1, 32>}, {transform_indices = @transform_2, window_bounds = array<i64: 1, 1>}, {transform_indices = @transform_3, window_bounds = array<i64: 2, 8>}, {transform_indices = @transform_4, window_bounds = array<i64: 2, 32>}, {transform_indices = @transform_5, window_bounds = array<i64: 2, 8, 3>}, {transform_indices = @transform_6, window_bounds = array<i64: 2, 8, 3>}]} {
    %c0 = arith.constant 0 : index
    %c0_0 = arith.constant 0 : index
    %c0_1 = arith.constant 0 : index
    %0 = vector.load %arg1[%c0, %c0_0, %c0_1] : memref<2x8x32xf32, #tpu.memory_space<vmem>>, vector<2x8x32xf32>
    %1 = arith.truncf %0 : vector<2x8x32xf32> to vector<2x8x32xbf16>
    "tpu.trace_start"() <{level = 10 : i32, message = "bsd,btd->bst"}> : () -> ()
    %cst = arith.constant dense<0.000000e+00> : vector<2x8x8xf32>
    %2 = tpu.matmul %1, %1, %cst {dimension_numbers = #tpu.dot_dimension_numbers<[2], [2], [1], [1], [0, 0, 0, 1, 1, 1], [0], [0]>} : vector<2x8x32xbf16>, vector<2x8x32xbf16>, vector<2x8x8xf32> -> vector<2x8x8xf32>
    "tpu.trace_stop"() : () -> ()
    %3 = arith.mulf %0, %0 : vector<2x8x32xf32>
    %cst_2 = arith.constant dense<0.000000e+00> : vector<2x8xf32>
    %4 = vector.multi_reduction <add>, %3, %cst_2 [2] : vector<2x8x32xf32> to vector<2x8xf32>
    %5 = vector.shape_cast %4 : vector<2x8xf32> to vector<2x8x1xf32>
    %6 = vector.shape_cast %4 : vector<2x8xf32> to vector<2x1x8xf32>
    %7 = vector.broadcast %5 : vector<2x8x1xf32> to vector<2x8x8xf32>
    %8 = vector.broadcast %6 : vector<2x1x8xf32> to vector<2x8x8xf32>
    %9 = arith.addf %7, %8 : vector<2x8x8xf32>
    %cst_3 = arith.constant 2.000000e+00 : f32
    %10 = vector.broadcast %cst_3 : f32 to vector<2x8x8xf32>
    %11 = arith.mulf %10, %2 : vector<2x8x8xf32>
    %12 = arith.subf %9, %11 : vector<2x8x8xf32>
    %cst_4 = arith.constant 0.000000e+00 : f32
    %13 = vector.broadcast %cst_4 : f32 to vector<2x8x8xf32>
    %14 = arith.maximumf %12, %13 : vector<2x8x8xf32>
    %c0_5 = arith.constant 0 : index
    %c0_6 = arith.constant 0 : index
    %15 = vector.load %arg2[%c0_5, %c0_6] : memref<1x32xf32, #tpu.memory_space<vmem>>, vector<1x32xf32>
    %16 = vector.shape_cast %15 : vector<1x32xf32> to vector<1x1x32xf32>
    %17 = vector.broadcast %16 : vector<1x1x32xf32> to vector<2x8x32xf32>
    %18 = arith.mulf %0, %17 : vector<2x8x32xf32>
    %cst_7 = arith.constant dense<0.000000e+00> : vector<2x8xf32>
    %19 = vector.multi_reduction <add>, %18, %cst_7 [2] : vector<2x8x32xf32> to vector<2x8xf32>
    %c0_8 = arith.constant 0 : index
    %c0_9 = arith.constant 0 : index
    %20 = memref.load %arg3[%c0_8, %c0_9] : memref<1x1xf32, #tpu.memory_space<smem>>
    %21 = vector.broadcast %20 : f32 to vector<2x8xf32>
    %22 = arith.addf %19, %21 : vector<2x8xf32>
    %cst_10 = arith.constant dense<0.000000e+00> : vector<2x8xf32>
    %23 = vector.multi_reduction <add>, %14, %cst_10 [2] : vector<2x8x8xf32> to vector<2x8xf32>
    %cst_11 = arith.constant 8.000000e+00 : f32
    %24 = vector.broadcast %cst_11 : f32 to vector<2x8xf32>
    %25 = arith.divf %23, %24 : vector<2x8xf32>
    %cst_12 = arith.constant 3.200000e+01 : f32
    %26 = vector.broadcast %cst_12 : f32 to vector<2x8xf32>
    %27 = arith.divf %25, %26 : vector<2x8xf32>
    %28 = arith.subf %22, %27 : vector<2x8xf32>
    %29 = arith.negf %28 : vector<2x8xf32>
    %30 = math.exp %29 : vector<2x8xf32>
    %cst_13 = arith.constant 1.000000e+00 : f32
    %31 = vector.broadcast %cst_13 : f32 to vector<2x8xf32>
    %32 = arith.addf %31, %30 : vector<2x8xf32>
    %33 = arith.divf %31, %32 : vector<2x8xf32>
    %c0_14 = arith.constant 0 : index
    %c0_15 = arith.constant 0 : index
    %34 = vector.load %arg4[%c0_14, %c0_15] : memref<2x8xf32, #tpu.memory_space<vmem>>, vector<2x8xf32>
    tpu.vector_store %arg4[%c0_14, %c0_15], %33 {strides = array<i32>} : memref<2x8xf32, #tpu.memory_space<vmem>>, vector<2x8xf32>,
    %cst_16 = arith.constant dense<0.000000e+00> : vector<2x32xf32>
    %35 = vector.multi_reduction <add>, %0, %cst_16 [1] : vector<2x8x32xf32> to vector<2x32xf32>
    %cst_17 = arith.constant 8.000000e+00 : f32
    %36 = vector.broadcast %cst_17 : f32 to vector<2x32xf32>
    %37 = arith.divf %35, %36 : vector<2x32xf32>
    %c0_18 = arith.constant 0 : index
    %c0_19 = arith.constant 0 : index
    %38 = vector.load %arg5[%c0_18, %c0_19] : memref<2x32xf32, #tpu.memory_space<vmem>>, vector<2x32xf32>
    tpu.vector_store %arg5[%c0_18, %c0_19], %37 {strides = array<i32>} : memref<2x32xf32, #tpu.memory_space<vmem>>, vector<2x32xf32>,
    %39 = tpu.iota {dimensions = array<i32: 2>} : vector<2x8x8xi32>
    %cst_20 = arith.constant dense<0x7F800000> : vector<2x8xf32>
    %40 = vector.multi_reduction <minimumf>, %14, %cst_20 [2] : vector<2x8x8xf32> to vector<2x8xf32>
    %41 = vector.shape_cast %40 : vector<2x8xf32> to vector<2x8x1xf32>
    %42 = vector.broadcast %41 : vector<2x8x1xf32> to vector<2x8x8xf32>
    %43 = arith.cmpf ole, %14, %42 : vector<2x8x8xf32>
    %c8_i32 = arith.constant 8 : i32
    %44 = vector.broadcast %c8_i32 : i32 to vector<2x8x8xi32>
    %45 = arith.select %43, %39, %44 : vector<2x8x8xi1>, vector<2x8x8xi32>
    %cst_21 = arith.constant dense<2147483647> : vector<2x8xi32>
    %46 = vector.multi_reduction <minsi>, %45, %cst_21 [2] : vector<2x8x8xi32> to vector<2x8xi32>
    %47 = vector.shape_cast %46 : vector<2x8xi32> to vector<2x8x1xi32>
    %c0_22 = arith.constant 0 : index
    %c0_23 = arith.constant 0 : index
    %c0_24 = arith.constant 0 : index
    %48 = vector.load %arg6[%c0_22, %c0_23, %c0_24] : memref<2x8x3xf32, #tpu.memory_space<vmem>>, vector<2x8x1xf32>
    tpu.vector_store %arg6[%c0_22, %c0_23, %c0_24], %41 {strides = array<i32>} : memref<2x8x3xf32, #tpu.memory_space<vmem>>, vector<2x8x1xf32>,
    %c0_25 = arith.constant 0 : index
    %c0_26 = arith.constant 0 : index
    %c0_27 = arith.constant 0 : index
    %49 = vector.load %arg7[%c0_25, %c0_26, %c0_27] : memref<2x8x3xi32, #tpu.memory_space<vmem>>, vector<2x8x1xi32>
    tpu.vector_store %arg7[%c0_25, %c0_26, %c0_27], %47 {strides = array<i32>} : memref<2x8x3xi32, #tpu.memory_space<vmem>>, vector<2x8x1xi32>,
    %50 = vector.broadcast %47 : vector<2x8x1xi32> to vector<2x8x8xi32>
    %51 = arith.cmpi eq, %39, %50 : vector<2x8x8xi32>
    %cst_28 = arith.constant 0x7F800000 : f32
    %52 = vector.broadcast %cst_28 : f32 to vector<2x8x8xf32>
    %53 = arith.select %51, %52, %14 : vector<2x8x8xi1>, vector<2x8x8xf32>
    %cst_29 = arith.constant dense<0x7F800000> : vector<2x8xf32>
    %54 = vector.multi_reduction <minimumf>, %53, %cst_29 [2] : vector<2x8x8xf32> to vector<2x8xf32>
    %55 = vector.shape_cast %54 : vector<2x8xf32> to vector<2x8x1xf32>
    %56 = vector.broadcast %55 : vector<2x8x1xf32> to vector<2x8x8xf32>
    %57 = arith.cmpf ole, %53, %56 : vector<2x8x8xf32>
    %c8_i32_30 = arith.constant 8 : i32
    %58 = vector.broadcast %c8_i32_30 : i32 to vector<2x8x8xi32>
    %59 = arith.select %57, %39, %58 : vector<2x8x8xi1>, vector<2x8x8xi32>
    %cst_31 = arith.constant dense<2147483647> : vector<2x8xi32>
    %60 = vector.multi_reduction <minsi>, %59, %cst_31 [2] : vector<2x8x8xi32> to vector<2x8xi32>
    %61 = vector.shape_cast %60 : vector<2x8xi32> to vector<2x8x1xi32>
    %c0_32 = arith.constant 0 : index
    %c0_33 = arith.constant 0 : index
    %c1 = arith.constant 1 : index
    %62 = vector.load %arg6[%c0_32, %c0_33, %c1] : memref<2x8x3xf32, #tpu.memory_space<vmem>>, vector<2x8x1xf32>
    tpu.vector_store %arg6[%c0_32, %c0_33, %c1], %55 {strides = array<i32>} : memref<2x8x3xf32, #tpu.memory_space<vmem>>, vector<2x8x1xf32>,
    %c0_34 = arith.constant 0 : index
    %c0_35 = arith.constant 0 : index
    %c1_36 = arith.constant 1 : index
    %63 = vector.load %arg7[%c0_34, %c0_35, %c1_36] : memref<2x8x3xi32, #tpu.memory_space<vmem>>, vector<2x8x1xi32>
    tpu.vector_store %arg7[%c0_34, %c0_35, %c1_36], %61 {strides = array<i32>} : memref<2x8x3xi32, #tpu.memory_space<vmem>>, vector<2x8x1xi32>,
    %64 = vector.broadcast %61 : vector<2x8x1xi32> to vector<2x8x8xi32>
    %65 = arith.cmpi eq, %39, %64 : vector<2x8x8xi32>
    %cst_37 = arith.constant 0x7F800000 : f32
    %66 = vector.broadcast %cst_37 : f32 to vector<2x8x8xf32>
    %67 = arith.select %65, %66, %53 : vector<2x8x8xi1>, vector<2x8x8xf32>
    %cst_38 = arith.constant dense<0x7F800000> : vector<2x8xf32>
    %68 = vector.multi_reduction <minimumf>, %67, %cst_38 [2] : vector<2x8x8xf32> to vector<2x8xf32>
    %69 = vector.shape_cast %68 : vector<2x8xf32> to vector<2x8x1xf32>
    %70 = vector.broadcast %69 : vector<2x8x1xf32> to vector<2x8x8xf32>
    %71 = arith.cmpf ole, %67, %70 : vector<2x8x8xf32>
    %c8_i32_39 = arith.constant 8 : i32
    %72 = vector.broadcast %c8_i32_39 : i32 to vector<2x8x8xi32>
    %73 = arith.select %71, %39, %72 : vector<2x8x8xi1>, vector<2x8x8xi32>
    %cst_40 = arith.constant dense<2147483647> : vector<2x8xi32>
    %74 = vector.multi_reduction <minsi>, %73, %cst_40 [2] : vector<2x8x8xi32> to vector<2x8xi32>
    %75 = vector.shape_cast %74 : vector<2x8xi32> to vector<2x8x1xi32>
    %c0_41 = arith.constant 0 : index
    %c0_42 = arith.constant 0 : index
    %c2 = arith.constant 2 : index
    %76 = vector.load %arg6[%c0_41, %c0_42, %c2] : memref<2x8x3xf32, #tpu.memory_space<vmem>>, vector<2x8x1xf32>
    tpu.vector_store %arg6[%c0_41, %c0_42, %c2], %69 {strides = array<i32>} : memref<2x8x3xf32, #tpu.memory_space<vmem>>, vector<2x8x1xf32>,
    %c0_43 = arith.constant 0 : index
    %c0_44 = arith.constant 0 : index
    %c2_45 = arith.constant 2 : index
    %77 = vector.load %arg7[%c0_43, %c0_44, %c2_45] : memref<2x8x3xi32, #tpu.memory_space<vmem>>, vector<2x8x1xi32>
    tpu.vector_store %arg7[%c0_43, %c0_44, %c2_45], %75 {strides = array<i32>} : memref<2x8x3xi32, #tpu.memory_space<vmem>>, vector<2x8x1xi32>,
    return
  }
  func.func @transform_0(%arg0: i32) -> (i32, i32, i32) {
    %c0_i32 = arith.constant 0 : i32
    %c0_i32_0 = arith.constant 0 : i32
    %c0_i32_1 = arith.constant 0 : i32
    return %arg0, %c0_i32, %c0_i32_0 : i32, i32, i32
  }
  func.func @transform_1(%arg0: i32) -> (i32, i32) {
    %c0_i32 = arith.constant 0 : i32
    %c0_i32_0 = arith.constant 0 : i32
    %c0_i32_1 = arith.constant 0 : i32
    return %c0_i32, %c0_i32_0 : i32, i32
  }
  func.func @transform_2(%arg0: i32) -> (i32, i32) {
    %c0_i32 = arith.constant 0 : i32
    %c0_i32_0 = arith.constant 0 : i32
    %c0_i32_1 = arith.constant 0 : i32
    return %c0_i32, %c0_i32_0 : i32, i32
  }
  func.func @transform_3(%arg0: i32) -> (i32, i32) {
    %c0_i32 = arith.constant 0 : i32
    %c0_i32_0 = arith.constant 0 : i32
    return %arg0, %c0_i32 : i32, i32
  }
  func.func @transform_4(%arg0: i32) -> (i32, i32) {
    %c0_i32 = arith.constant 0 : i32
    %c0_i32_0 = arith.constant 0 : i32
    return %arg0, %c0_i32 : i32, i32
  }
  func.func @transform_5(%arg0: i32) -> (i32, i32, i32) {
    %c0_i32 = arith.constant 0 : i32
    %c0_i32_0 = arith.constant 0 : i32
    %c0_i32_1 = arith.constant 0 : i32
    return %arg0, %c0_i32, %c0_i32_0 : i32, i32, i32
  }
  func.func @transform_6(%arg0: i32) -> (i32, i32, i32) {
    %c0_i32 = arith.constant 0 : i32
    %c0_i32_0 = arith.constant 0 : i32
    %c0_i32_1 = arith.constant 0 : i32
    return %arg0, %c0_i32, %c0_i32_0 : i32, i32, i32
  }
}

module attributes {stable_mosaic.version = 11 : i64} {
  func.func @_retrieve_kernel(%arg0: i32, %arg1: memref<2x32xf32, #tpu.memory_space<vmem>>, %arg2: memref<64x32xf32, #tpu.memory_space<vmem>>, %arg3: memref<2x64xf32, #tpu.memory_space<vmem>>) attributes {dimension_semantics = [#tpu.dimension_semantics<parallel>], iteration_bounds = array<i64: 1>, scalar_prefetch = 0 : i64, scratch_operands = 0 : i64, tpu.core_type = #tpu.core_type<tc>, window_params = [{pipeline_mode = #tpu.pipeline_mode<synchronous>, transform_indices = @transform_0, window_bounds = array<i64: 2, 32>}, {transform_indices = @transform_1, window_bounds = array<i64: 64, 32>}, {transform_indices = @transform_2, window_bounds = array<i64: 2, 64>}]} {
    %c0 = arith.constant 0 : index
    %c0_0 = arith.constant 0 : index
    %0 = vector.load %arg1[%c0, %c0_0] : memref<2x32xf32, #tpu.memory_space<vmem>>, vector<2x32xf32>
    %1 = arith.truncf %0 : vector<2x32xf32> to vector<2x32xbf16>
    %c0_1 = arith.constant 0 : index
    %c0_2 = arith.constant 0 : index
    %2 = vector.load %arg2[%c0_1, %c0_2] : memref<64x32xf32, #tpu.memory_space<vmem>>, vector<64x32xf32>
    %3 = arith.truncf %2 : vector<64x32xf32> to vector<64x32xbf16>
    %cst = arith.constant dense<0.000000e+00> : vector<2x64xf32>
    %4 = tpu.matmul %1, %3, %cst {dimension_numbers = #tpu.dot_dimension_numbers<[1], [1], [0], [0], [0, 0, 1, 0], [], []>} : vector<2x32xbf16>, vector<64x32xbf16>, vector<2x64xf32> -> vector<2x64xf32>
    %c0_3 = arith.constant 0 : index
    %c0_4 = arith.constant 0 : index
    %5 = vector.load %arg3[%c0_3, %c0_4] : memref<2x64xf32, #tpu.memory_space<vmem>>, vector<2x64xf32>
    tpu.vector_store %arg3[%c0_3, %c0_4], %4 {strides = array<i32>} : memref<2x64xf32, #tpu.memory_space<vmem>>, vector<2x64xf32>,
    return
  }
  func.func @transform_0(%arg0: i32) -> (i32, i32) {
    %c0_i32 = arith.constant 0 : i32
    %c0_i32_0 = arith.constant 0 : i32
    %c0_i32_1 = arith.constant 0 : i32
    return %c0_i32, %c0_i32_0 : i32, i32
  }
  func.func @transform_1(%arg0: i32) -> (i32, i32) {
    %c0_i32 = arith.constant 0 : i32
    %c0_i32_0 = arith.constant 0 : i32
    return %arg0, %c0_i32 : i32, i32
  }
  func.func @transform_2(%arg0: i32) -> (i32, i32) {
    %c0_i32 = arith.constant 0 : i32
    %c0_i32_0 = arith.constant 0 : i32
    return %c0_i32, %arg0 : i32, i32
  }
}

</mosaic_0001>

<llo_original>
// kernel: neg.1
$region0: #{neg.1}
  #allocation0 [shape = 's32[1]{0}', space=sflag, size = 0x4, scoped, tag = 'scoped memory for neg.1']
  %s0 = inlined_call_operand.vmem [shape: f32[2,8], index: 0, kind: input, shape index: {}]
  %s1 = inlined_call_operand.vmem [shape: f32[2,8], index: 1, kind: output, shape index: {}]
  %v2 = vld [vmem:[%s0] sm:$0x3]
  %3 = xla_tuple %v2
  %4 = xla_tuple %3
  %v5 = vxor.u32 %v2, 2147483648
  %6 = xla_tuple %v5
  %7 = vst [vmem:[%s1] sm:$0x3] %v5

// kernel: rag_query_optimizer_forward.3
$region0: #{rag_query_optimizer_forward.3}
  #allocation0 [shape = 'u32[]', space=smem, size = 0x4, offset = 0x4, fixed_abs, tag = 'smem constant byte address 0x4 - core index']
  #allocation1 [shape = 'u32[144,128]{1,0:T(1,128)}', space=vmem, size = 0x12000, scoped, tag = 'internal scratch']
  %s0 = inlined_call_operand.vmem [shape: f32[2,32], index: 0, kind: input, shape index: {}]
  %s1 = inlined_call_operand.vmem [shape: f32[64,32], index: 1, kind: input, shape index: {}]
  %s2 = inlined_call_operand.vmem [shape: f32[2,64], index: 2, kind: output, shape index: {}]
  %s3 = sld [smem:[#allocation0]]
  $region18: #{rag_query_optimizer_forward.3} parent=0
    _
  %s5 = ssub.s32 1, %s3
  %s6 = scalar_select 0, %s5, %s3
  // Predicated region
  $region2: #{rag_query_optimizer_forward.3} parent=0 // pred_check
    _
  $region3: #{rag_query_optimizer_forward.3} parent=0 // pred_check_branch
    %8 = sbr.rel (0) target = $region5
  $region4: #{rag_query_optimizer_forward.3} parent=0 // pred_region
    _
  $region5: #{rag_query_optimizer_forward.3} parent=0 // pred_fallthru
    _
  // Predicated region
  $region6: #{rag_query_optimizer_forward.3} parent=0 // pred_check
    _
  $region7: #{rag_query_optimizer_forward.3} parent=0 // pred_check_branch
    %10 = sbr.rel (0) target = $region9
  $region8: #{rag_query_optimizer_forward.3} parent=0 // pred_region
    _
  $region9: #{rag_query_optimizer_forward.3} parent=0 // pred_fallthru
    _
  %v12 = vld [vmem:[%s0] sm:$0x3]
  %v13 = vpack.c.bf16 %v12, %v12
  %v14 = vld [vmem:[%s1] sm:$0xff]
  %v15 = vld [vmem:[%s1 + $0x8] sm:$0xff]
  %v16 = vld [vmem:[%s1 + $0x10] sm:$0xff]
  %v17 = vld [vmem:[%s1 + $0x18] sm:$0xff]
  %v18 = vld [vmem:[%s1 + $0x20] sm:$0xff]
  %v19 = vld [vmem:[%s1 + $0x28] sm:$0xff]
  %v20 = vld [vmem:[%s1 + $0x30] sm:$0xff]
  %v21 = vld [vmem:[%s1 + $0x38] sm:$0xff]
  %v22 = vpack.c.bf16 %v15, %v14
  %v23 = vpack.c.bf16 %v17, %v16
  %v24 = vpack.c.bf16 %v19, %v18
  %v25 = vpack.c.bf16 %v21, %v20
  %vm26 = vcmask 261120
  %v28 = vsel %vm26, %v13, 0
  %v31 = vsel %vm26, %v22, 0
  %v34 = vsel %vm26, %v23, 0
  %v37 = vsel %vm26, %v24, 0
  %v40 = vsel %vm26, %v25, 0
  %42 = vmatprep.subr.bf16.mxu0 0
  %43 = vmatpush1.bf16.xpose.msra.mxu0 %v31
  %44 = vmatprep.subr.bf16.mxu0 0
  %45 = vmatpush1.bf16.xpose.msra.mxu0 %v34
  %46 = vmatprep.subr.bf16.mxu0 0
  %47 = vmatpush1.bf16.xpose.msra.mxu0 %v37
  %48 = vmatprep.subr.bf16.mxu0 0
  %49 = vmatpush1.bf16.xpose.msra.mxu0 %v40
  %50 = vmatprep.subr.bf16.mxu0 0
  %51 = vmatpush1.bf16.xpose.msra.mxu0 0
  %52 = vmatprep.subr.bf16.mxu0 0
  %53 = vmatpush1.bf16.xpose.msra.mxu0 0
  %54 = vmatprep.subr.bf16.mxu0 0
  %55 = vmatpush1.bf16.xpose.msra.mxu0 0
  %56 = vmatprep.subr.bf16.mxu0 0
  %57 = vmatpush1.bf16.xpose.msra.mxu0 0
  %58 = vmatprep.subr.bf16.mxu0 0
  %59 = vmatpush1.bf16.xpose.msra.mxu0 0
  %60 = vmatprep.subr.bf16.mxu0 0
  %61 = vmatpush1.bf16.xpose.msra.mxu0 0
  %62 = vmatprep.subr.bf16.mxu0 0
  %63 = vmatpush1.bf16.xpose.msra.mxu0 0
  %64 = vmatprep.subr.bf16.mxu0 0
  %65 = vmatpush1.bf16.xpose.msra.mxu0 0
  %66 = vmatprep.subr.bf16.mxu0 0
  %67 = vmatpush1.bf16.xpose.msra.mxu0 0
  %68 = vmatprep.subr.bf16.mxu0 0
  %69 = vmatpush1.bf16.xpose.msra.mxu0 0
  %70 = vmatprep.subr.bf16.mxu0 0
  %71 = vmatpush1.bf16.xpose.msra.mxu0 0
  %72 = vmatprep.subr.bf16.mxu0 0
  %73 = vmatpush1.bf16.xpose.msra.mxu0 0
  %74 = vmatprep.mubr.bf16.mxu0 0
  %75 = vmatmul.mubr.bf16.gmra.mrb[0].mxu0 %v28
  %v76 = vpop.f32.mrb[0].mxu0
  %v77 = vadd.f32 0.0, %v76
  %v78 = vpop.f32.mrb[0].mxu0
  %v79 = vpop.f32.mrb[0].mxu0
  %v80 = vpop.f32.mrb[0].mxu0
  %81 = vdwg.mxu0
  %vm82 = vcmask 517120
  %83 = vst.msk [vmem:[%s2] sm:$0x3] %vm82, %v77
  // Predicated region
  $region10: #{rag_query_optimizer_forward.3} parent=0 // pred_check
    _
  $region11: #{rag_query_optimizer_forward.3} parent=0 // pred_check_branch
    %85 = sbr.rel (0) target = $region13
  $region12: #{rag_query_optimizer_forward.3} parent=0 // pred_region
    _
  $region13: #{rag_query_optimizer_forward.3} parent=0 // pred_fallthru
    _
  // Predicated region
  $region14: #{rag_query_optimizer_forward.3} parent=0 // pred_check
    _
  $region15: #{rag_query_optimizer_forward.3} parent=0 // pred_check_branch
    %87 = sbr.rel (0) target = $region17
  $region16: #{rag_query_optimizer_forward.3} parent=0 // pred_region
    _
  $region17: #{rag_query_optimizer_forward.3} parent=0 // pred_fallthru
    _

// kernel: rag_query_optimizer_forward.2
$region0: #{rag_query_optimizer_forward.2}
  #allocation0 [shape = 'u32[]', space=smem, size = 0x4, offset = 0x4, fixed_abs, tag = 'smem constant byte address 0x4 - core index']
  #allocation1 [shape = 'u32[144,128]{1,0:T(1,128)}', space=vmem, size = 0x12000, scoped, tag = 'internal scratch']
  #allocation2 [shape = 'f32[1,1]{1,0:T(1,128)S(6)}', space=smem, size = 0x200, scoped, tag = 'scoped memory for rag_query_optimizer_forward.2']
  %s0 = inlined_call_operand.vmem [shape: f32[2,8,32], index: 0, kind: input, shape index: {}]
  %s1 = inlined_call_operand.vmem [shape: f32[1,32], index: 1, kind: input, shape index: {}]
  %s2 = inlined_call_operand.<no memory space> [shape: f32[1,1], index: 2, kind: input, shape index: {}]
  %s3 = inlined_call_operand.vmem [shape: f32[2,8], index: 3, kind: output, shape index: {0}]
  %s4 = inlined_call_operand.vmem [shape: f32[2,32], index: 4, kind: output, shape index: {1}]
  %s5 = inlined_call_operand.vmem [shape: f32[2,8,3], index: 5, kind: output, shape index: {2}]
  %s6 = inlined_call_operand.vmem [shape: s32[2,8,3], index: 6, kind: output, shape index: {3}]
  %7 = xla_tuple %s3, %s4, %s5, %s6
  %s8 = sld [smem:[#allocation0]]
  $region46: #{rag_query_optimizer_forward.2} parent=0
    _
  %s10 = ssub.s32 1, %s8
  %s11 = scalar_select 0, %s10, %s8
  %12 = sst [smem:[#allocation2]] %s2
  // Predicated region
  $region2: #{rag_query_optimizer_forward.2} parent=0 // pred_check
    _
  $region3: #{rag_query_optimizer_forward.2} parent=0 // pred_check_branch
    %14 = sbr.rel (0) target = $region5
  $region4: #{rag_query_optimizer_forward.2} parent=0 // pred_region
    _
  $region5: #{rag_query_optimizer_forward.2} parent=0 // pred_fallthru
    _
  // Predicated region
  $region6: #{rag_query_optimizer_forward.2} parent=0 // pred_check
    _
  $region7: #{rag_query_optimizer_forward.2} parent=0 // pred_check_branch
    %16 = sbr.rel (0) target = $region9
  $region8: #{rag_query_optimizer_forward.2} parent=0 // pred_region
    _
  $region9: #{rag_query_optimizer_forward.2} parent=0 // pred_fallthru
    _
  // Predicated region
  $region10: #{rag_query_optimizer_forward.2} parent=0 // pred_check
    _
  $region11: #{rag_query_optimizer_forward.2} parent=0 // pred_check_branch
    %18 = sbr.rel (0) target = $region13
  $region12: #{rag_query_optimizer_forward.2} parent=0 // pred_region
    _
  $region13: #{rag_query_optimizer_forward.2} parent=0 // pred_fallthru
    _
  %v20 = vld [vmem:[%s0] sm:$0xff]
  %v21 = vld [vmem:[%s0 + $0x8] sm:$0xff]
  %v22 = vpack.c.bf16 %v20, %v20
  %v23 = vpack.c.bf16 %v21, %v21
  %vm24 = vcmask 261120
  %v26 = vsel %vm24, %v22, 0
  %28 = vmatprep.subr.bf16.mxu0 0
  %29 = vmatpush1.bf16.xpose.msra.mxu0 %v26
  %30 = vmatprep.subr.bf16.mxu0 0
  %31 = vmatpush1.bf16.xpose.msra.mxu0 0
  %32 = vmatprep.subr.bf16.mxu0 0
  %33 = vmatpush1.bf16.xpose.msra.mxu0 0
  %34 = vmatprep.subr.bf16.mxu0 0
  %35 = vmatpush1.bf16.xpose.msra.mxu0 0
  %36 = vmatprep.subr.bf16.mxu0 0
  %37 = vmatpush1.bf16.xpose.msra.mxu0 0
  %38 = vmatprep.subr.bf16.mxu0 0
  %39 = vmatpush1.bf16.xpose.msra.mxu0 0
  %40 = vmatprep.subr.bf16.mxu0 0
  %41 = vmatpush1.bf16.xpose.msra.mxu0 0
  %42 = vmatprep.subr.bf16.mxu0 0
  %43 = vmatpush1.bf16.xpose.msra.mxu0 0
  %44 = vmatprep.subr.bf16.mxu0 0
  %45 = vmatpush1.bf16.xpose.msra.mxu0 0
  %46 = vmatprep.subr.bf16.mxu0 0
  %47 = vmatpush1.bf16.xpose.msra.mxu0 0
  %48 = vmatprep.subr.bf16.mxu0 0
  %49 = vmatpush1.bf16.xpose.msra.mxu0 0
  %50 = vmatprep.subr.bf16.mxu0 0
  %51 = vmatpush1.bf16.xpose.msra.mxu0 0
  %52 = vmatprep.subr.bf16.mxu0 0
  %53 = vmatpush1.bf16.xpose.msra.mxu0 0
  %54 = vmatprep.subr.bf16.mxu0 0
  %55 = vmatpush1.bf16.xpose.msra.mxu0 0
  %56 = vmatprep.subr.bf16.mxu0 0
  %57 = vmatpush1.bf16.xpose.msra.mxu0 0
  %58 = vmatprep.subr.bf16.mxu0 0
  %59 = vmatpush1.bf16.xpose.msra.mxu0 0
  %60 = vmatprep.mubr.bf16.mxu0 0
  %61 = vmatmul.mubr.bf16.gmra.mrb[0].mxu0 %v26
  %v62 = vpop.f32.mrb[0].mxu0
  %v63 = vadd.f32 0.0, %v62
  %v64 = vpop.f32.mrb[0].mxu0
  %v65 = vpop.f32.mrb[0].mxu0
  %v66 = vpop.f32.mrb[0].mxu0
  %67 = vdwg.mxu0
  %v69 = vsel %vm24, %v23, 0
  %71 = vmatprep.subr.bf16.mxu0 0
  %72 = vmatpush1.bf16.xpose.msra.mxu0 %v69
  %73 = vmatprep.subr.bf16.mxu0 0
  %74 = vmatpush1.bf16.xpose.msra.mxu0 0
  %75 = vmatprep.subr.bf16.mxu0 0
  %76 = vmatpush1.bf16.xpose.msra.mxu0 0
  %77 = vmatprep.subr.bf16.mxu0 0
  %78 = vmatpush1.bf16.xpose.msra.mxu0 0
  %79 = vmatprep.subr.bf16.mxu0 0
  %80 = vmatpush1.bf16.xpose.msra.mxu0 0
  %81 = vmatprep.subr.bf16.mxu0 0
  %82 = vmatpush1.bf16.xpose.msra.mxu0 0
  %83 = vmatprep.subr.bf16.mxu0 0
  %84 = vmatpush1.bf16.xpose.msra.mxu0 0
  %85 = vmatprep.subr.bf16.mxu0 0
  %86 = vmatpush1.bf16.xpose.msra.mxu0 0
  %87 = vmatprep.subr.bf16.mxu0 0
  %88 = vmatpush1.bf16.xpose.msra.mxu0 0
  %89 = vmatprep.subr.bf16.mxu0 0
  %90 = vmatpush1.bf16.xpose.msra.mxu0 0
  %91 = vmatprep.subr.bf16.mxu0 0
  %92 = vmatpush1.bf16.xpose.msra.mxu0 0
  %93 = vmatprep.subr.bf16.mxu0 0
  %94 = vmatpush1.bf16.xpose.msra.mxu0 0
  %95 = vmatprep.subr.bf16.mxu0 0
  %96 = vmatpush1.bf16.xpose.msra.mxu0 0
  %97 = vmatprep.subr.bf16.mxu0 0
  %98 = vmatpush1.bf16.xpose.msra.mxu0 0
  %99 = vmatprep.subr.bf16.mxu0 0
  %100 = vmatpush1.bf16.xpose.msra.mxu0 0
  %101 = vmatprep.subr.bf16.mxu0 0
  %102 = vmatpush1.bf16.xpose.msra.mxu0 0
  %103 = vmatprep.mubr.bf16.mxu0 0
  %104 = vmatmul.mubr.bf16.gmra.mrb[0].mxu0 %v69
  %v105 = vpop.f32.mrb[0].mxu0
  %v106 = vadd.f32 0.0, %v105
  %v107 = vpop.f32.mrb[0].mxu0
  %v108 = vpop.f32.mrb[0].mxu0
  %v109 = vpop.f32.mrb[0].mxu0
  %110 = vdwg.mxu0
  %v111 = vmul.f32 %v20, %v20
  %v112 = vmul.f32 %v21, %v21
  %v113 = vsel %vm24, %v111, 0.0
  %114 = vadd.xlane.f32.xlu0 %v113
  %v115 = vpop.xlane.xlu0 %114
  %v116 = vsel %vm24, %v112, 0.0
  %117 = vadd.xlane.f32.xlu0 %v116
  %v118 = vpop.xlane.xlu0 %117
  %v121 = vlaneseq
  %v122 = vand.u32 %v121, 127
  %v123 = vlaneseq
  %v124 = vshrl.u32 %v123, 7
  %v125 = vsub.s32 %v122, %v124
  %v126 = vrot.slane %v115, %v125
  %v127 = vlaneseq
  %v128 = vshrl.u32 %v127, 7
  %v129 = vsub.s32 %v122, %v128
  %v130 = vrot.slane %v118, %v129
  %vm131 = vcmask 1041409
  %vm132 = vcmask 1042434
  %v133 = vsel %vm132, %v126, %v126
  %vm134 = vcmask 1043459
  %v135 = vsel %vm134, %v126, %v133
  %vm136 = vcmask 1044484
  %v137 = vsel %vm136, %v126, %v135
  %vm138 = vcmask 1045509
  %v139 = vsel %vm138, %v126, %v137
  %vm140 = vcmask 1046534
  %v141 = vsel %vm140, %v126, %v139
  %vm142 = vcmask 1047559
  %v143 = vsel %vm142, %v126, %v141
  %v144 = vsel %vm132, %v130, %v130
  %v145 = vsel %vm134, %v130, %v144
  %v146 = vsel %vm136, %v130, %v145
  %v147 = vsel %vm138, %v130, %v146
  %v148 = vsel %vm140, %v130, %v147
  %v149 = vsel %vm142, %v130, %v148
  %v152 = vadd.f32 %v115, %v143
  %v153 = vadd.f32 %v118, %v149
  %v154 = vmul.f32 %v63, 2.0
  %v155 = vmul.f32 %v106, 2.0
  %v156 = vsub.f32 %v152, %v154
  %v157 = vsub.f32 %v153, %v155
  %v158 = vmax.f32 %v156, 0.0
  %v159 = vmax.f32 %v157, 0.0
  %v160 = vld [vmem:[%s1] sm:$0x1]
  %v162 = vlaneseq
  %v163 = vshrl.u32 %v162, 7
  %v164 = vsub.s32 0, %v163
  %v165 = vrot.slane %v160, %v164
  %v167 = vmul.f32 %v20, %v165
  %v168 = vmul.f32 %v21, %v165
  %v169 = vsel %vm24, %v167, 0.0
  %170 = vadd.xlane.f32.xlu0 %v169
  %v171 = vpop.xlane.xlu0 %170
  %v172 = vsel %vm24, %v168, 0.0
  %173 = vadd.xlane.f32.xlu0 %v172
  %v174 = vpop.xlane.xlu0 %173
  %s175 = sld [smem:[#allocation2]]
  %v176 = vstv %s175
  %v177 = vadd.f32 %v171, %v176
  %v178 = vadd.f32 %v174, %v176
  %vm179 = vcmask 64512
  %v180 = vsel %vm179, %v158, 0.0
  %181 = vadd.xlane.f32.xlu0 %v180
  %v182 = vpop.xlane.xlu0 %181
  %v183 = vsel %vm179, %v159, 0.0
  %184 = vadd.xlane.f32.xlu0 %v183
  %v185 = vpop.xlane.xlu0 %184
  %v186 = vrcp.pop 8.0
  %v187 = vmul.f32 %v182, %v186
  %v188 = vmul.f32 %v185, %v186
  %v189 = vrcp.pop 32.0
  %v190 = vmul.f32 %v187, %v189
  %v191 = vmul.f32 %v188, %v189
  %v192 = vsub.f32 %v177, %v190
  %v193 = vsub.f32 %v178, %v191
  %v194 = vxor.u32 %v192, 2147483648
  %v195 = vxor.u32 %v193, 2147483648
  %v196 = vmul.f32 %v194, 1.442695
  %v197 = vpow.pop %v196
  %v198 = vmul.f32 %v195, 1.442695
  %v199 = vpow.pop %v198
  %v200 = vadd.f32 %v197, 1.0
  %v201 = vadd.f32 %v199, 1.0
  %v202 = vrcp.pop %v200
  %v203 = vmul.f32 1.0, %v202
  %v204 = vrcp.pop %v201
  %v205 = vmul.f32 1.0, %v204
  %v208 = vlaneseq
  %v209 = vshrl.u32 %v208, 7
  %v210 = vsub.s32 %v122, %v209
  %v211 = vrot.slane %v203, %v210
  %v212 = vlaneseq
  %v213 = vshrl.u32 %v212, 7
  %v214 = vsub.s32 %v122, %v213
  %v215 = vrot.slane %v205, %v214
  %v216 = vsel %vm131, %v215, %v211
  %vm218 = vcmask 58368
  %219 = vst.msk [vmem:[%s3] sm:$0x3] %vm218, %v216
  %v220 = vsel %vm24, %v20, 0.0
  %v221 = vrot.slane %v220, 4
  %v222 = vadd.f32 %v220, %v221
  %v223 = vrot.slane %v222, 2
  %v224 = vadd.f32 %v222, %v223
  %v225 = vrot.slane %v224, 1
  %v226 = vadd.f32 %v224, %v225
  %v227 = vsel %vm24, %v21, 0.0
  %v228 = vrot.slane %v227, 4
  %v229 = vadd.f32 %v227, %v228
  %v230 = vrot.slane %v229, 2
  %v231 = vadd.f32 %v229, %v230
  %v232 = vrot.slane %v231, 1
  %v233 = vadd.f32 %v231, %v232
  %v234 = vmul.f32 %v226, %v186
  %v235 = vmul.f32 %v233, %v186
  %v238 = vsel %vm131, %v235, %v234
  %vm240 = vcmask 254976
  %241 = vst.msk [vmem:[%s4] sm:$0x3] %vm240, %v238
  %v242 = vsel %vm179, %v158, inf
  %243 = vmin.xlane.f32.xlu0 %v242
  %v244 = vpop.xlane.xlu0 %243
  %v245 = vsel %vm179, %v159, inf
  %246 = vmin.xlane.f32.xlu0 %v245
  %v247 = vpop.xlane.xlu0 %246
  %vm248 = vcmp.le.f32.partialorder %v158, %v244
  %vm249 = vcmp.le.f32.partialorder %v159, %v247
  %v250 = vsel %vm248, %v122, 8
  %v251 = vsel %vm249, %v122, 8
  %v252 = vsel %vm179, %v250, 2147483647
  %v253 = vand.u32 %v252, 65535
  %v254 = vshra.s32 %v252, 16
  %v255 = vcvt.s32.f32 %v253
  %v256 = vcvt.s32.f32 %v254
  %257 = vmin.xlane.f32.xlu0 %v256
  %v258 = vpop.xlane.xlu0 %257
  %vm259 = vcmp.eq.f32.partialorder %v256, %v258
  %v260 = vsel %vm259, %v255, inf
  %261 = vmin.xlane.f32.xlu0 %v260
  %v262 = vpop.xlane.xlu0 %261
  %v263 = vcvt.f32.s32 %v262
  %v264 = vcvt.f32.s32 %v258
  %v265 = vshll.u32 %v264, 16
  %v266 = vadd.s32 %v265, %v263
  %v267 = vsel %vm179, %v251, 2147483647
  %v268 = vand.u32 %v267, 65535
  %v269 = vshra.s32 %v267, 16
  %v270 = vcvt.s32.f32 %v268
  %v271 = vcvt.s32.f32 %v269
  %272 = vmin.xlane.f32.xlu0 %v271
  %v273 = vpop.xlane.xlu0 %272
  %vm274 = vcmp.eq.f32.partialorder %v271, %v273
  %v275 = vsel %vm274, %v270, inf
  %276 = vmin.xlane.f32.xlu0 %v275
  %v277 = vpop.xlane.xlu0 %276
  %v278 = vcvt.f32.s32 %v277
  %v279 = vcvt.f32.s32 %v273
  %v280 = vshll.u32 %v279, 16
  %v281 = vadd.s32 %v280, %v278
  %vm282 = vcmask 7168
  %283 = vst.msk [vmem:[%s5] sm:$0xff] %vm282, %v244
  %284 = vst.msk [vmem:[%s5 + $0x8] sm:$0xff] %vm282, %v247
  %285 = vst.msk [vmem:[%s6] sm:$0xff] %vm282, %v266
  %286 = vst.msk [vmem:[%s6 + $0x8] sm:$0xff] %vm282, %v281
  %vm287 = vcmp.eq.s32.totalorder %v122, %v266
  %vm288 = vcmp.eq.s32.totalorder %v122, %v281
  %v289 = vsel %vm287, inf, %v158
  %v290 = vsel %vm288, inf, %v159
  %v291 = vsel %vm179, %v289, inf
  %292 = vmin.xlane.f32.xlu0 %v291
  %v293 = vpop.xlane.xlu0 %292
  %v294 = vsel %vm179, %v290, inf
  %295 = vmin.xlane.f32.xlu0 %v294
  %v296 = vpop.xlane.xlu0 %295
  %vm297 = vcmp.le.f32.partialorder %v289, %v293
  %vm298 = vcmp.le.f32.partialorder %v290, %v296
  %v299 = vsel %vm297, %v122, 8
  %v300 = vsel %vm298, %v122, 8
  %v301 = vsel %vm179, %v299, 2147483647
  %v302 = vand.u32 %v301, 65535
  %v303 = vshra.s32 %v301, 16
  %v304 = vcvt.s32.f32 %v302
  %v305 = vcvt.s32.f32 %v303
  %306 = vmin.xlane.f32.xlu0 %v305
  %v307 = vpop.xlane.xlu0 %306
  %vm308 = vcmp.eq.f32.partialorder %v305, %v307
  %v309 = vsel %vm308, %v304, inf
  %310 = vmin.xlane.f32.xlu0 %v309
  %v311 = vpop.xlane.xlu0 %310
  %v312 = vcvt.f32.s32 %v311
  %v313 = vcvt.f32.s32 %v307
  %v314 = vshll.u32 %v313, 16
  %v315 = vadd.s32 %v314, %v312
  %v316 = vsel %vm179, %v300, 2147483647
  %v317 = vand.u32 %v316, 65535
  %v318 = vshra.s32 %v316, 16
  %v319 = vcvt.s32.f32 %v317
  %v320 = vcvt.s32.f32 %v318
  %321 = vmin.xlane.f32.xlu0 %v320
  %v322 = vpop.xlane.xlu0 %321
  %vm323 = vcmp.eq.f32.partialorder %v320, %v322
  %v324 = vsel %vm323, %v319, inf
  %325 = vmin.xlane.f32.xlu0 %v324
  %v326 = vpop.xlane.xlu0 %325
  %v327 = vcvt.f32.s32 %v326
  %v328 = vcvt.f32.s32 %v322
  %v329 = vshll.u32 %v328, 16
  %v330 = vadd.s32 %v329, %v327
  %vm331 = vcmask 15368
  %332 = vst.msk [vmem:[%s5] sm:$0xff] %vm331, %v293
  %333 = vst.msk [vmem:[%s5 + $0x8] sm:$0xff] %vm331, %v296
  %334 = vst.msk [vmem:[%s6] sm:$0xff] %vm331, %v315
  %335 = vst.msk [vmem:[%s6 + $0x8] sm:$0xff] %vm331, %v330
  %vm336 = vcmp.eq.s32.totalorder %v122, %v315
  %vm337 = vcmp.eq.s32.totalorder %v122, %v330
  %v338 = vsel %vm336, inf, %v289
  %v339 = vsel %vm337, inf, %v290
  %v340 = vsel %vm179, %v338, inf
  %341 = vmin.xlane.f32.xlu0 %v340
  %v342 = vpop.xlane.xlu0 %341
  %v343 = vsel %vm179, %v339, inf
  %344 = vmin.xlane.f32.xlu0 %v343
  %v345 = vpop.xlane.xlu0 %344
  %vm346 = vcmp.le.f32.partialorder %v338, %v342
  %vm347 = vcmp.le.f32.partialorder %v339, %v345
  %v348 = vsel %vm346, %v122, 8
  %v349 = vsel %vm347, %v122, 8
  %v350 = vsel %vm179, %v348, 2147483647
  %v351 = vand.u32 %v350, 65535
  %v352 = vshra.s32 %v350, 16
  %v353 = vcvt.s32.f32 %v351
  %v354 = vcvt.s32.f32 %v352
  %355 = vmin.xlane.f32.xlu0 %v354
  %v356 = vpop.xlane.xlu0 %355
  %vm357 = vcmp.eq.f32.partialorder %v354, %v356
  %v358 = vsel %vm357, %v353, inf
  %359 = vmin.xlane.f32.xlu0 %v358
  %v360 = vpop.xlane.xlu0 %359
  %v361 = vcvt.f32.s32 %v360
  %v362 = vcvt.f32.s32 %v356
  %v363 = vshll.u32 %v362, 16
  %v364 = vadd.s32 %v363, %v361
  %v365 = vsel %vm179, %v349, 2147483647
  %v366 = vand.u32 %v365, 65535
  %v367 = vshra.s32 %v365, 16
  %v368 = vcvt.s32.f32 %v366
  %v369 = vcvt.s32.f32 %v367
  %370 = vmin.xlane.f32.xlu0 %v369
  %v371 = vpop.xlane.xlu0 %370
  %vm372 = vcmp.eq.f32.partialorder %v369, %v371
  %v373 = vsel %vm372, %v368, inf
  %374 = vmin.xlane.f32.xlu0 %v373
  %v375 = vpop.xlane.xlu0 %374
  %v376 = vcvt.f32.s32 %v375
  %v377 = vcvt.f32.s32 %v371
  %v378 = vshll.u32 %v377, 16
  %v379 = vadd.s32 %v378, %v376
  %vm380 = vcmask 23568
  %381 = vst.msk [vmem:[%s5] sm:$0xff] %vm380, %v342
  %382 = vst.msk [vmem:[%s5 + $0x8] sm:$0xff] %vm380, %v345
  %383 = vst.msk [vmem:[%s6] sm:$0xff] %vm380, %v364
  %384 = vst.msk [vmem:[%s6 + $0x8] sm:$0xff] %vm380, %v379
  // Predicated region
  $region14: #{rag_query_optimizer_forward.2} parent=0 // pred_check
    _
  $region15: #{rag_query_optimizer_forward.2} parent=0 // pred_check_branch
    %386 = sbr.rel (0) target = $region17
  $region16: #{rag_query_optimizer_forward.2} parent=0 // pred_region
    _
  $region17: #{rag_query_optimizer_forward.2} parent=0 // pred_fallthru
    _
  // Predicated region
  $region18: #{rag_query_optimizer_forward.2} parent=0 // pred_check
    _
  $region19: #{rag_query_optimizer_forward.2} parent=0 // pred_check_branch
    %388 = sbr.rel (0) target = $region21
  $region20: #{rag_query_optimizer_forward.2} parent=0 // pred_region
    _
  $region21: #{rag_query_optimizer_forward.2} parent=0 // pred_fallthru
    _
  // Predicated region
  $region22: #{rag_query_optimizer_forward.2} parent=0 // pred_check
    _
  $region23: #{rag_query_optimizer_forward.2} parent=0 // pred_check_branch
    %390 = sbr.rel (0) target = $region25
  $region24: #{rag_query_optimizer_forward.2} parent=0 // pred_region
    _
  $region25: #{rag_query_optimizer_forward.2} parent=0 // pred_fallthru
    _
  // Predicated region
  $region26: #{rag_query_optimizer_forward.2} parent=0 // pred_check
    _
  $region27: #{rag_query_optimizer_forward.2} parent=0 // pred_check_branch
    %392 = sbr.rel (0) target = $region29
  $region28: #{rag_query_optimizer_forward.2} parent=0 // pred_region
    _
  $region29: #{rag_query_optimizer_forward.2} parent=0 // pred_fallthru
    _
  // Predicated region
  $region30: #{rag_query_optimizer_forward.2} parent=0 // pred_check
    _
  $region31: #{rag_query_optimizer_forward.2} parent=0 // pred_check_branch
    %394 = sbr.rel (0) target = $region33
  $region32: #{rag_query_optimizer_forward.2} parent=0 // pred_region
    _
  $region33: #{rag_query_optimizer_forward.2} parent=0 // pred_fallthru
    _
  // Predicated region
  $region34: #{rag_query_optimizer_forward.2} parent=0 // pred_check
    _
  $region35: #{rag_query_optimizer_forward.2} parent=0 // pred_check_branch
    %396 = sbr.rel (0) target = $region37
  $region36: #{rag_query_optimizer_forward.2} parent=0 // pred_region
    _
  $region37: #{rag_query_optimizer_forward.2} parent=0 // pred_fallthru
    _
  // Predicated region
  $region38: #{rag_query_optimizer_forward.2} parent=0 // pred_check
    _
  $region39: #{rag_query_optimizer_forward.2} parent=0 // pred_check_branch
    %398 = sbr.rel (0) target = $region41
  $region40: #{rag_query_optimizer_forward.2} parent=0 // pred_region
    _
  $region41: #{rag_query_optimizer_forward.2} parent=0 // pred_fallthru
    _
  // Predicated region
  $region42: #{rag_query_optimizer_forward.2} parent=0 // pred_check
    _
  $region43: #{rag_query_optimizer_forward.2} parent=0 // pred_check_branch
    %400 = sbr.rel (0) target = $region45
  $region44: #{rag_query_optimizer_forward.2} parent=0 // pred_region
    _
  $region45: #{rag_query_optimizer_forward.2} parent=0 // pred_fallthru
    _

</llo_original>
